<compile_context>
chip_gen: v6e
topology: v6e:2x2x1
jax: 0.10.0
libtpu: 0.0.40
codegen_flags: <defaults>
</compile_context>

<pallas_src>
from functools import partial

import numpy as np
import jax
import jax.numpy as jnp
from jax.experimental import pallas as pl
from jax.experimental.pallas import tpu as pltpu


def _vmem_limit_bytes():
    """Generation-aware scoped-VMEM budget: ~half of physical, never below 32 MiB."""
    try:
        cap = pltpu.get_tpu_info().vmem_capacity_bytes
        return int(max(32 * 1024 * 1024, min(cap // 2, 100 * 1024 * 1024)))
    except Exception:
        return None  # fall back to the compiler default


_VMEM_LIMIT = _vmem_limit_bytes()


def conv3x3_kernel(x_ref, w_ref, m_ref, conv_ref, stat_ref, *, Co, H, W):
    """One batch element: 3x3 'SAME' conv as 9 per-tap (Co,Cin)@(Cin,H*W) MXU matmuls
    accumulated in f32, plus per-sample BN partial sums.

    x_ref : (1, Cin, H*W + 2W + 2) bf16  flat image, zero-extended by W+1 lanes per side
    w_ref : (9, Co, Cin)           bf16  tap-major weights (tap t = (dy+1)*3 + (dx+1))
    m_ref : (2, H*W)               bf16  column masks for dx = -1 / +1
    conv_ref : (1, Co, H*W)        bf16  lane-dense conv output (NC(HW) layout)
    stat_ref : (1, Co, 2)          f32   per-sample [sum, sum_of_squares] per channel
    """
    HW = H * W
    base = W + 1
    xv = x_ref[0]          # (Cin, Le)
    mv = m_ref[...]        # (2, HW)

    acc = jnp.zeros((Co, HW), jnp.float32)
    for dy in (-1, 0, 1):
        for dx in (-1, 0, 1):
            t = (dy + 1) * 3 + (dx + 1)
            off = base + dy * W + dx
            tap = xv[:, off:off + HW]                 # shifted image, (Cin, HW)
            if dx == -1:
                tap = tap * mv[0:1, :]                # zero the w == 0 column
            elif dx == 1:
                tap = tap * mv[1:2, :]                # zero the w == W-1 column
            acc = acc + jnp.dot(w_ref[t], tap, preferred_element_type=jnp.float32)

    conv = acc.astype(conv_ref.dtype)                 # bf16-rounded values pass 2 will read
    conv_ref[...] = conv.reshape(1, Co, HW)

    # BN partial sums from the values actually stored (stats consistent with pass 2).
    # NOTE: sum / sum-of-squares in f32; for very large N*H*W a centered combine is better.
    v = conv.astype(jnp.float32)
    s1 = v.sum(axis=-1, keepdims=True)                # (Co, 1)
    s2 = (v * v).sum(axis=-1, keepdims=True)          # (Co, 1)
    stat_ref[...] = jnp.concatenate([s1, s2], axis=1).reshape(1, Co, 2)


def bn_tanh_kernel(c_ref, scale_ref, shift_ref, y_ref):
    """y = tanh(conv * scale + shift); bf16 load, f32 math (v5e has no bf16 VPU/EUP)."""
    x = c_ref[...].astype(jnp.float32)                # (bn, Co, HW)
    s = scale_ref[...].reshape(1, -1, 1)              # (1, Co, 1)
    b = shift_ref[...].reshape(1, -1, 1)
    y_ref[...] = jnp.tanh(x * s + b)


def _batch_block(N, Co, HW):
    """Largest divisor of N whose pass-2 working set stays comfortably inside VMEM."""
    per_row = Co * HW * (2 + 4) * 2                   # bf16 in + f32 out, double-buffered
    bn = max(1, min(N, (8 * 1024 * 1024) // max(per_row, 1)))
    while N % bn:
        bn -= 1
    return bn


@jax.jit
def conv2d_bn_tanh(x_nchw, weight, bias, gamma, beta, eps=1e-5):
    N, Cin, H, W = x_nchw.shape
    Cout = weight.shape[0]
    HW = H * W
    Co = ((Cout + 7) // 8) * 8                        # sublane-aligned output channels
    Le = HW + 2 * (W + 1)                             # zero-extended flat-image length

    # Conv bias cancels exactly under training-mode BatchNorm -> dropped from the compute.
    del bias

    # Flat bf16 image, zero-extended by W+1 lanes on each side so every 3x3 tap is a static
    # lane slice (row padding lands in the zero extension; column padding via the masks).
    xe = jnp.pad(x_nchw.reshape(N, Cin, HW).astype(jnp.bfloat16),
                 ((0, 0), (0, 0), (W + 1, W + 1)))

    # PyTorch weight [Cout, Cin, 3, 3] -> (9, Co, Cin) bf16, tap-major (t = ky*3 + kx).
    w9 = jnp.transpose(weight.astype(jnp.float32), (2, 3, 0, 1)).reshape(9, Cout, Cin)
    w9 = jnp.pad(w9, ((0, 0), (0, Co - Cout), (0, 0))).astype(jnp.bfloat16)

    # Column masks for the dx = -1 / +1 taps ({0,1} in bf16 -> exact multiply).
    wcol = np.arange(HW) % W
    masks = jnp.asarray(np.stack([wcol >= 1, wcol <= W - 2]).astype(np.float32),
                        dtype=jnp.bfloat16)

    conv, psums = pl.pallas_call(
        partial(conv3x3_kernel, Co=Co, H=H, W=W),
        out_shape=(jax.ShapeDtypeStruct((N, Co, HW), jnp.bfloat16),
                   jax.ShapeDtypeStruct((N, Co, 2), jnp.float32)),
        grid=(N,),
        in_specs=[pl.BlockSpec((1, Cin, Le), lambda n: (n, 0, 0)),
                  pl.BlockSpec((9, Co, Cin), lambda n: (0, 0, 0)),
                  pl.BlockSpec((2, HW), lambda n: (0, 0))],
        out_specs=(pl.BlockSpec((1, Co, HW), lambda n: (n, 0, 0)),
                   pl.BlockSpec((1, Co, 2), lambda n: (n, 0, 0))),
        compiler_params=pltpu.CompilerParams(
            dimension_semantics=("parallel",),
            vmem_limit_bytes=_VMEM_LIMIT),
    )(xe, w9, masks)

    # BatchNorm2d training-mode statistics (biased variance) from the f32 partial sums.
    count = N * HW
    sums = psums.sum(axis=0)                          # (Co, 2)
    mean = sums[:, 0] / count
    var = jnp.maximum(sums[:, 1] / count - mean * mean, 0.0)
    gamma_p = jnp.pad(gamma.astype(jnp.float32), (0, Co - Cout))
    beta_p = jnp.pad(beta.astype(jnp.float32), (0, Co - Cout))
    scale = gamma_p / jnp.sqrt(var + eps)
    shift = beta_p - mean * scale

    # Fused BN + tanh on lane-dense (Co, H*W) tiles, several batch rows per grid step.
    bn = _batch_block(N, Co, HW)
    y = pl.pallas_call(
        bn_tanh_kernel,
        out_shape=jax.ShapeDtypeStruct((N, Co, HW), jnp.float32),
        grid=(N // bn,),
        in_specs=[pl.BlockSpec((bn, Co, HW), lambda i: (i, 0, 0)),
                  pl.BlockSpec((Co, 1), lambda i: (0, 0)),
                  pl.BlockSpec((Co, 1), lambda i: (0, 0))],
        out_specs=pl.BlockSpec((bn, Co, HW), lambda i: (i, 0, 0)),
        compiler_params=pltpu.CompilerParams(
            dimension_semantics=("parallel",),
            vmem_limit_bytes=_VMEM_LIMIT),
    )(conv, scale.reshape(Co, 1), shift.reshape(Co, 1))

    # (N, Co, H*W) -> (N, Co, H, W) is a free bitcast; drop channel padding if any.
    y = y.reshape(N, Co, H, W)
    if Co != Cout:
        y = y[:, :Cout]
    return y


if __name__ == "__main__":
    key = jax.random.PRNGKey(0)
    N, Cin, H, W, Cout = 2, 4, 16, 16, 8
    k1, k2, k3 = jax.random.split(key, 3)

    x = jax.random.normal(k1, (N, Cin, H, W), jnp.float32)

    # Deterministic parameter init (shapes per nn.Conv2d / nn.BatchNorm2d defaults).
    fan_in = Cin * 3 * 3
    bound = 1.0 / (fan_in ** 0.5)
    weight = jax.random.uniform(k2, (Cout, Cin, 3, 3), jnp.float32, -bound, bound)
    bias = jax.random.uniform(k3, (Cout,), jnp.float32, -bound, bound)
    gamma = jnp.ones((Cout,), jnp.float32)   # BatchNorm2d weight init
    beta = jnp.zeros((Cout,), jnp.float32)   # BatchNorm2d bias init

    y = conv2d_bn_tanh(x, weight, bias, gamma, beta)
    jax.block_until_ready(y)
    assert y.shape == (N, Cout, H, W)
    assert bool(jnp.all(jnp.isfinite(y)))

    # Pure-JAX f32 reference (conv + bias + training-mode BN + tanh) for a sanity check.
    cr = jax.lax.conv_general_dilated(
        x, weight, (1, 1), "SAME",
        dimension_numbers=("NCHW", "OIHW", "NCHW")) + bias.reshape(1, Cout, 1, 1)
    m = cr.mean(axis=(0, 2, 3), keepdims=True)
    v = cr.var(axis=(0, 2, 3), keepdims=True)
    ref = jnp.tanh((cr - m) / jnp.sqrt(v + 1e-5) * gamma.reshape(1, Cout, 1, 1)
                   + beta.reshape(1, Cout, 1, 1))
    err = float(jnp.max(jnp.abs(y - ref)))
    assert err < 5e-2, err  # bf16 input/weight/intermediate tolerance

    print("KERNEL_OK")
</pallas_src>

<mosaic_0001>
module attributes {stable_mosaic.version = 11 : i64} {
  func.func @conv3x3_kernel(%arg0: i32, %arg1: memref<1x4x290xbf16, #tpu.memory_space<vmem>>, %arg2: memref<9x8x4xbf16, #tpu.memory_space<vmem>>, %arg3: memref<2x256xbf16, #tpu.memory_space<vmem>>, %arg4: memref<1x8x256xbf16, #tpu.memory_space<vmem>>, %arg5: memref<1x8x2xf32, #tpu.memory_space<vmem>>) attributes {dimension_semantics = [#tpu.dimension_semantics<parallel>], iteration_bounds = array<i64: 2>, scalar_prefetch = 0 : i64, scratch_operands = 0 : i64, tpu.core_type = #tpu.core_type<tc>, window_params = [{transform_indices = @transform_0, window_bounds = array<i64: 1, 4, 290>}, {pipeline_mode = #tpu.pipeline_mode<synchronous>, transform_indices = @transform_1, window_bounds = array<i64: 9, 8, 4>}, {pipeline_mode = #tpu.pipeline_mode<synchronous>, transform_indices = @transform_2, window_bounds = array<i64: 2, 256>}, {transform_indices = @transform_3, window_bounds = array<i64: 1, 8, 256>}, {transform_indices = @transform_4, window_bounds = array<i64: 1, 8, 2>}]} {
    %c0 = arith.constant 0 : index
    %c0_0 = arith.constant 0 : index
    %c0_1 = arith.constant 0 : index
    %0 = vector.load %arg1[%c0, %c0_0, %c0_1] : memref<1x4x290xbf16, #tpu.memory_space<vmem>>, vector<1x4x290xbf16>
    %1 = vector.shape_cast %0 : vector<1x4x290xbf16> to vector<4x290xbf16>
    %c0_2 = arith.constant 0 : index
    %c0_3 = arith.constant 0 : index
    %2 = vector.load %arg3[%c0_2, %c0_3] : memref<2x256xbf16, #tpu.memory_space<vmem>>, vector<2x256xbf16>
    %cst = arith.constant 0.000000e+00 : f32
    %3 = vector.broadcast %cst : f32 to vector<8x256xf32>
    %4 = vector.extract_strided_slice %1 {offsets = [0, 0], sizes = [4, 256], strides = [1, 1]} : vector<4x290xbf16> to vector<4x256xbf16>
    %5 = vector.extract_strided_slice %2 {offsets = [0, 0], sizes = [1, 256], strides = [1, 1]} : vector<2x256xbf16> to vector<1x256xbf16>
    %6 = vector.broadcast %5 : vector<1x256xbf16> to vector<4x256xbf16>
    %7 = arith.mulf %4, %6 : vector<4x256xbf16>
    %c0_4 = arith.constant 0 : index
    %c0_5 = arith.constant 0 : index
    %c0_6 = arith.constant 0 : index
    %8 = vector.load %arg2[%c0_4, %c0_5, %c0_6] : memref<9x8x4xbf16, #tpu.memory_space<vmem>>, vector<1x8x4xbf16>
    %9 = vector.shape_cast %8 : vector<1x8x4xbf16> to vector<8x4xbf16>
    %cst_7 = arith.constant dense<0.000000e+00> : vector<8x256xf32>
    %10 = tpu.matmul %9, %7, %cst_7 {dimension_numbers = #tpu.dot_dimension_numbers<[1], [0], [0], [1], [0, 0, 1, 1], [], []>} : vector<8x4xbf16>, vector<4x256xbf16>, vector<8x256xf32> -> vector<8x256xf32>
    %11 = arith.addf %3, %10 : vector<8x256xf32>
    %12 = vector.extract_strided_slice %1 {offsets = [0, 1], sizes = [4, 256], strides = [1, 1]} : vector<4x290xbf16> to vector<4x256xbf16>
    %c1 = arith.constant 1 : index
    %c0_8 = arith.constant 0 : index
    %c0_9 = arith.constant 0 : index
    %13 = vector.load %arg2[%c1, %c0_8, %c0_9] : memref<9x8x4xbf16, #tpu.memory_space<vmem>>, vector<1x8x4xbf16>
    %14 = vector.shape_cast %13 : vector<1x8x4xbf16> to vector<8x4xbf16>
    %cst_10 = arith.constant dense<0.000000e+00> : vector<8x256xf32>
    %15 = tpu.matmul %14, %12, %cst_10 {dimension_numbers = #tpu.dot_dimension_numbers<[1], [0], [0], [1], [0, 0, 1, 1], [], []>} : vector<8x4xbf16>, vector<4x256xbf16>, vector<8x256xf32> -> vector<8x256xf32>
    %16 = arith.addf %11, %15 : vector<8x256xf32>
    %17 = vector.extract_strided_slice %1 {offsets = [0, 2], sizes = [4, 256], strides = [1, 1]} : vector<4x290xbf16> to vector<4x256xbf16>
    %18 = vector.extract_strided_slice %2 {offsets = [1, 0], sizes = [1, 256], strides = [1, 1]} : vector<2x256xbf16> to vector<1x256xbf16>
    %19 = vector.broadcast %18 : vector<1x256xbf16> to vector<4x256xbf16>
    %20 = arith.mulf %17, %19 : vector<4x256xbf16>
    %c2 = arith.constant 2 : index
    %c0_11 = arith.constant 0 : index
    %c0_12 = arith.constant 0 : index
    %21 = vector.load %arg2[%c2, %c0_11, %c0_12] : memref<9x8x4xbf16, #tpu.memory_space<vmem>>, vector<1x8x4xbf16>
    %22 = vector.shape_cast %21 : vector<1x8x4xbf16> to vector<8x4xbf16>
    %cst_13 = arith.constant dense<0.000000e+00> : vector<8x256xf32>
    %23 = tpu.matmul %22, %20, %cst_13 {dimension_numbers = #tpu.dot_dimension_numbers<[1], [0], [0], [1], [0, 0, 1, 1], [], []>} : vector<8x4xbf16>, vector<4x256xbf16>, vector<8x256xf32> -> vector<8x256xf32>
    %24 = arith.addf %16, %23 : vector<8x256xf32>
    %25 = vector.extract_strided_slice %1 {offsets = [0, 16], sizes = [4, 256], strides = [1, 1]} : vector<4x290xbf16> to vector<4x256xbf16>
    %26 = vector.extract_strided_slice %2 {offsets = [0, 0], sizes = [1, 256], strides = [1, 1]} : vector<2x256xbf16> to vector<1x256xbf16>
    %27 = vector.broadcast %26 : vector<1x256xbf16> to vector<4x256xbf16>
    %28 = arith.mulf %25, %27 : vector<4x256xbf16>
    %c3 = arith.constant 3 : index
    %c0_14 = arith.constant 0 : index
    %c0_15 = arith.constant 0 : index
    %29 = vector.load %arg2[%c3, %c0_14, %c0_15] : memref<9x8x4xbf16, #tpu.memory_space<vmem>>, vector<1x8x4xbf16>
    %30 = vector.shape_cast %29 : vector<1x8x4xbf16> to vector<8x4xbf16>
    %cst_16 = arith.constant dense<0.000000e+00> : vector<8x256xf32>
    %31 = tpu.matmul %30, %28, %cst_16 {dimension_numbers = #tpu.dot_dimension_numbers<[1], [0], [0], [1], [0, 0, 1, 1], [], []>} : vector<8x4xbf16>, vector<4x256xbf16>, vector<8x256xf32> -> vector<8x256xf32>
    %32 = arith.addf %24, %31 : vector<8x256xf32>
    %33 = vector.extract_strided_slice %1 {offsets = [0, 17], sizes = [4, 256], strides = [1, 1]} : vector<4x290xbf16> to vector<4x256xbf16>
    %c4 = arith.constant 4 : index
    %c0_17 = arith.constant 0 : index
    %c0_18 = arith.constant 0 : index
    %34 = vector.load %arg2[%c4, %c0_17, %c0_18] : memref<9x8x4xbf16, #tpu.memory_space<vmem>>, vector<1x8x4xbf16>
    %35 = vector.shape_cast %34 : vector<1x8x4xbf16> to vector<8x4xbf16>
    %cst_19 = arith.constant dense<0.000000e+00> : vector<8x256xf32>
    %36 = tpu.matmul %35, %33, %cst_19 {dimension_numbers = #tpu.dot_dimension_numbers<[1], [0], [0], [1], [0, 0, 1, 1], [], []>} : vector<8x4xbf16>, vector<4x256xbf16>, vector<8x256xf32> -> vector<8x256xf32>
    %37 = arith.addf %32, %36 : vector<8x256xf32>
    %38 = vector.extract_strided_slice %1 {offsets = [0, 18], sizes = [4, 256], strides = [1, 1]} : vector<4x290xbf16> to vector<4x256xbf16>
    %39 = vector.extract_strided_slice %2 {offsets = [1, 0], sizes = [1, 256], strides = [1, 1]} : vector<2x256xbf16> to vector<1x256xbf16>
    %40 = vector.broadcast %39 : vector<1x256xbf16> to vector<4x256xbf16>
    %41 = arith.mulf %38, %40 : vector<4x256xbf16>
    %c5 = arith.constant 5 : index
    %c0_20 = arith.constant 0 : index
    %c0_21 = arith.constant 0 : index
    %42 = vector.load %arg2[%c5, %c0_20, %c0_21] : memref<9x8x4xbf16, #tpu.memory_space<vmem>>, vector<1x8x4xbf16>
    %43 = vector.shape_cast %42 : vector<1x8x4xbf16> to vector<8x4xbf16>
    %cst_22 = arith.constant dense<0.000000e+00> : vector<8x256xf32>
    %44 = tpu.matmul %43, %41, %cst_22 {dimension_numbers = #tpu.dot_dimension_numbers<[1], [0], [0], [1], [0, 0, 1, 1], [], []>} : vector<8x4xbf16>, vector<4x256xbf16>, vector<8x256xf32> -> vector<8x256xf32>
    %45 = arith.addf %37, %44 : vector<8x256xf32>
    %46 = vector.extract_strided_slice %1 {offsets = [0, 32], sizes = [4, 256], strides = [1, 1]} : vector<4x290xbf16> to vector<4x256xbf16>
    %47 = vector.extract_strided_slice %2 {offsets = [0, 0], sizes = [1, 256], strides = [1, 1]} : vector<2x256xbf16> to vector<1x256xbf16>
    %48 = vector.broadcast %47 : vector<1x256xbf16> to vector<4x256xbf16>
    %49 = arith.mulf %46, %48 : vector<4x256xbf16>
    %c6 = arith.constant 6 : index
    %c0_23 = arith.constant 0 : index
    %c0_24 = arith.constant 0 : index
    %50 = vector.load %arg2[%c6, %c0_23, %c0_24] : memref<9x8x4xbf16, #tpu.memory_space<vmem>>, vector<1x8x4xbf16>
    %51 = vector.shape_cast %50 : vector<1x8x4xbf16> to vector<8x4xbf16>
    %cst_25 = arith.constant dense<0.000000e+00> : vector<8x256xf32>
    %52 = tpu.matmul %51, %49, %cst_25 {dimension_numbers = #tpu.dot_dimension_numbers<[1], [0], [0], [1], [0, 0, 1, 1], [], []>} : vector<8x4xbf16>, vector<4x256xbf16>, vector<8x256xf32> -> vector<8x256xf32>
    %53 = arith.addf %45, %52 : vector<8x256xf32>
    %54 = vector.extract_strided_slice %1 {offsets = [0, 33], sizes = [4, 256], strides = [1, 1]} : vector<4x290xbf16> to vector<4x256xbf16>
    %c7 = arith.constant 7 : index
    %c0_26 = arith.constant 0 : index
    %c0_27 = arith.constant 0 : index
    %55 = vector.load %arg2[%c7, %c0_26, %c0_27] : memref<9x8x4xbf16, #tpu.memory_space<vmem>>, vector<1x8x4xbf16>
    %56 = vector.shape_cast %55 : vector<1x8x4xbf16> to vector<8x4xbf16>
    %cst_28 = arith.constant dense<0.000000e+00> : vector<8x256xf32>
    %57 = tpu.matmul %56, %54, %cst_28 {dimension_numbers = #tpu.dot_dimension_numbers<[1], [0], [0], [1], [0, 0, 1, 1], [], []>} : vector<8x4xbf16>, vector<4x256xbf16>, vector<8x256xf32> -> vector<8x256xf32>
    %58 = arith.addf %53, %57 : vector<8x256xf32>
    %59 = vector.extract_strided_slice %1 {offsets = [0, 34], sizes = [4, 256], strides = [1, 1]} : vector<4x290xbf16> to vector<4x256xbf16>
    %60 = vector.extract_strided_slice %2 {offsets = [1, 0], sizes = [1, 256], strides = [1, 1]} : vector<2x256xbf16> to vector<1x256xbf16>
    %61 = vector.broadcast %60 : vector<1x256xbf16> to vector<4x256xbf16>
    %62 = arith.mulf %59, %61 : vector<4x256xbf16>
    %c8 = arith.constant 8 : index
    %c0_29 = arith.constant 0 : index
    %c0_30 = arith.constant 0 : index
    %63 = vector.load %arg2[%c8, %c0_29, %c0_30] : memref<9x8x4xbf16, #tpu.memory_space<vmem>>, vector<1x8x4xbf16>
    %64 = vector.shape_cast %63 : vector<1x8x4xbf16> to vector<8x4xbf16>
    %cst_31 = arith.constant dense<0.000000e+00> : vector<8x256xf32>
    %65 = tpu.matmul %64, %62, %cst_31 {dimension_numbers = #tpu.dot_dimension_numbers<[1], [0], [0], [1], [0, 0, 1, 1], [], []>} : vector<8x4xbf16>, vector<4x256xbf16>, vector<8x256xf32> -> vector<8x256xf32>
    %66 = arith.addf %58, %65 : vector<8x256xf32>
    %67 = arith.truncf %66 : vector<8x256xf32> to vector<8x256xbf16>
    %68 = vector.shape_cast %67 : vector<8x256xbf16> to vector<1x8x256xbf16>
    %c0_32 = arith.constant 0 : index
    %c0_33 = arith.constant 0 : index
    %c0_34 = arith.constant 0 : index
    %69 = vector.load %arg4[%c0_32, %c0_33, %c0_34] : memref<1x8x256xbf16, #tpu.memory_space<vmem>>, vector<1x8x256xbf16>
    tpu.vector_store %arg4[%c0_32, %c0_33, %c0_34], %68 {strides = array<i32>} : memref<1x8x256xbf16, #tpu.memory_space<vmem>>, vector<1x8x256xbf16>,
    %70 = arith.extf %67 : vector<8x256xbf16> to vector<8x256xf32>
    %cst_35 = arith.constant dense<0.000000e+00> : vector<8xf32>
    %71 = vector.multi_reduction <add>, %70, %cst_35 [1] : vector<8x256xf32> to vector<8xf32>
    %72 = vector.shape_cast %71 : vector<8xf32> to vector<8x1xf32>
    %73 = arith.mulf %70, %70 : vector<8x256xf32>
    %cst_36 = arith.constant dense<0.000000e+00> : vector<8xf32>
    %74 = vector.multi_reduction <add>, %73, %cst_36 [1] : vector<8x256xf32> to vector<8xf32>
    %75 = vector.shape_cast %74 : vector<8xf32> to vector<8x1xf32>
    %76 = tpu.concatenate %72, %75 in 1 : vector<8x1xf32>, vector<8x1xf32> -> vector<8x2xf32>
    %77 = vector.shape_cast %76 : vector<8x2xf32> to vector<1x8x2xf32>
    %c0_37 = arith.constant 0 : index
    %c0_38 = arith.constant 0 : index
    %c0_39 = arith.constant 0 : index
    %78 = vector.load %arg5[%c0_37, %c0_38, %c0_39] : memref<1x8x2xf32, #tpu.memory_space<vmem>>, vector<1x8x2xf32>
    tpu.vector_store %arg5[%c0_37, %c0_38, %c0_39], %77 {strides = array<i32>} : memref<1x8x2xf32, #tpu.memory_space<vmem>>, vector<1x8x2xf32>,
    return
  }
  func.func @transform_0(%arg0: i32) -> (i32, i32, i32) {
    %c0_i32 = arith.constant 0 : i32
    %c0_i32_0 = arith.constant 0 : i32
    %c0_i32_1 = arith.constant 0 : i32
    return %arg0, %c0_i32, %c0_i32_0 : i32, i32, i32
  }
  func.func @transform_1(%arg0: i32) -> (i32, i32, i32) {
    %c0_i32 = arith.constant 0 : i32
    %c0_i32_0 = arith.constant 0 : i32
    %c0_i32_1 = arith.constant 0 : i32
    %c0_i32_2 = arith.constant 0 : i32
    return %c0_i32, %c0_i32_0, %c0_i32_1 : i32, i32, i32
  }
  func.func @transform_2(%arg0: i32) -> (i32, i32) {
    %c0_i32 = arith.constant 0 : i32
    %c0_i32_0 = arith.constant 0 : i32
    %c0_i32_1 = arith.constant 0 : i32
    return %c0_i32, %c0_i32_0 : i32, i32
  }
  func.func @transform_3(%arg0: i32) -> (i32, i32, i32) {
    %c0_i32 = arith.constant 0 : i32
    %c0_i32_0 = arith.constant 0 : i32
    %c0_i32_1 = arith.constant 0 : i32
    return %arg0, %c0_i32, %c0_i32_0 : i32, i32, i32
  }
  func.func @transform_4(%arg0: i32) -> (i32, i32, i32) {
    %c0_i32 = arith.constant 0 : i32
    %c0_i32_0 = arith.constant 0 : i32
    %c0_i32_1 = arith.constant 0 : i32
    return %arg0, %c0_i32, %c0_i32_0 : i32, i32, i32
  }
}

module attributes {stable_mosaic.version = 11 : i64} {
  func.func @bn_tanh_kernel(%arg0: i32, %arg1: memref<2x8x256xbf16, #tpu.memory_space<vmem>>, %arg2: memref<8x1xf32, #tpu.memory_space<vmem>>, %arg3: memref<8x1xf32, #tpu.memory_space<vmem>>, %arg4: memref<2x8x256xf32, #tpu.memory_space<vmem>>) attributes {dimension_semantics = [#tpu.dimension_semantics<parallel>], iteration_bounds = array<i64: 1>, scalar_prefetch = 0 : i64, scratch_operands = 0 : i64, tpu.core_type = #tpu.core_type<tc>, window_params = [{transform_indices = @transform_0, window_bounds = array<i64: 2, 8, 256>}, {pipeline_mode = #tpu.pipeline_mode<synchronous>, transform_indices = @transform_1, window_bounds = array<i64: 8, 1>}, {pipeline_mode = #tpu.pipeline_mode<synchronous>, transform_indices = @transform_2, window_bounds = array<i64: 8, 1>}, {transform_indices = @transform_3, window_bounds = array<i64: 2, 8, 256>}]} {
    %c0 = arith.constant 0 : index
    %c0_0 = arith.constant 0 : index
    %c0_1 = arith.constant 0 : index
    %0 = vector.load %arg1[%c0, %c0_0, %c0_1] : memref<2x8x256xbf16, #tpu.memory_space<vmem>>, vector<2x8x256xbf16>
    %1 = arith.extf %0 : vector<2x8x256xbf16> to vector<2x8x256xf32>
    %c0_2 = arith.constant 0 : index
    %c0_3 = arith.constant 0 : index
    %2 = vector.load %arg2[%c0_2, %c0_3] : memref<8x1xf32, #tpu.memory_space<vmem>>, vector<8x1xf32>
    %3 = vector.shape_cast %2 : vector<8x1xf32> to vector<1x8x1xf32>
    %c0_4 = arith.constant 0 : index
    %c0_5 = arith.constant 0 : index
    %4 = vector.load %arg3[%c0_4, %c0_5] : memref<8x1xf32, #tpu.memory_space<vmem>>, vector<8x1xf32>
    %5 = vector.shape_cast %4 : vector<8x1xf32> to vector<1x8x1xf32>
    %6 = vector.broadcast %3 : vector<1x8x1xf32> to vector<2x8x256xf32>
    %7 = arith.mulf %1, %6 : vector<2x8x256xf32>
    %8 = vector.broadcast %5 : vector<1x8x1xf32> to vector<2x8x256xf32>
    %9 = arith.addf %7, %8 : vector<2x8x256xf32>
    %10 = math.tanh %9 : vector<2x8x256xf32>
    %c0_6 = arith.constant 0 : index
    %c0_7 = arith.constant 0 : index
    %c0_8 = arith.constant 0 : index
    %11 = vector.load %arg4[%c0_6, %c0_7, %c0_8] : memref<2x8x256xf32, #tpu.memory_space<vmem>>, vector<2x8x256xf32>
    tpu.vector_store %arg4[%c0_6, %c0_7, %c0_8], %10 {strides = array<i32>} : memref<2x8x256xf32, #tpu.memory_space<vmem>>, vector<2x8x256xf32>,
    return
  }
  func.func @transform_0(%arg0: i32) -> (i32, i32, i32) {
    %c0_i32 = arith.constant 0 : i32
    %c0_i32_0 = arith.constant 0 : i32
    %c0_i32_1 = arith.constant 0 : i32
    return %arg0, %c0_i32, %c0_i32_0 : i32, i32, i32
  }
  func.func @transform_1(%arg0: i32) -> (i32, i32) {
    %c0_i32 = arith.constant 0 : i32
    %c0_i32_0 = arith.constant 0 : i32
    %c0_i32_1 = arith.constant 0 : i32
    return %c0_i32, %c0_i32_0 : i32, i32
  }
  func.func @transform_2(%arg0: i32) -> (i32, i32) {
    %c0_i32 = arith.constant 0 : i32
    %c0_i32_0 = arith.constant 0 : i32
    %c0_i32_1 = arith.constant 0 : i32
    return %c0_i32, %c0_i32_0 : i32, i32
  }
  func.func @transform_3(%arg0: i32) -> (i32, i32, i32) {
    %c0_i32 = arith.constant 0 : i32
    %c0_i32_0 = arith.constant 0 : i32
    %c0_i32_1 = arith.constant 0 : i32
    return %arg0, %c0_i32, %c0_i32_0 : i32, i32, i32
  }
}

</mosaic_0001>

<llo_original>
// kernel: conv2d_bn_tanh.3
$region0: #{conv2d_bn_tanh.3}
  #allocation0 [shape = 'u32[]', space=smem, size = 0x4, offset = 0x4, fixed_abs, tag = 'smem constant byte address 0x4 - core index']
  #allocation1 [shape = 'u32[144,128]{1,0:T(1,128)}', space=vmem, size = 0x12000, scoped, tag = 'internal scratch']
  %s0 = inlined_call_operand.vmem [shape: bf16[2,8,256], index: 0, kind: input, shape index: {}]
  %s1 = inlined_call_operand.vmem [shape: f32[8,1], index: 1, kind: input, shape index: {}]
  %s2 = inlined_call_operand.vmem [shape: f32[8,1], index: 2, kind: input, shape index: {}]
  %s3 = inlined_call_operand.vmem [shape: f32[2,8,256], index: 3, kind: output, shape index: {}]
  %s4 = sld [smem:[#allocation0]]
  $region22: #{conv2d_bn_tanh.3} parent=0
    _
  %s6 = ssub.s32 1, %s4
  %s7 = scalar_select 0, %s6, %s4
  // Predicated region
  $region2: #{conv2d_bn_tanh.3} parent=0 // pred_check
    _
  $region3: #{conv2d_bn_tanh.3} parent=0 // pred_check_branch
    %9 = sbr.rel (0) target = $region5
  $region4: #{conv2d_bn_tanh.3} parent=0 // pred_region
    _
  $region5: #{conv2d_bn_tanh.3} parent=0 // pred_fallthru
    _
  // Predicated region
  $region6: #{conv2d_bn_tanh.3} parent=0 // pred_check
    _
  $region7: #{conv2d_bn_tanh.3} parent=0 // pred_check_branch
    %11 = sbr.rel (0) target = $region9
  $region8: #{conv2d_bn_tanh.3} parent=0 // pred_region
    _
  $region9: #{conv2d_bn_tanh.3} parent=0 // pred_fallthru
    _
  // Predicated region
  $region10: #{conv2d_bn_tanh.3} parent=0 // pred_check
    _
  $region11: #{conv2d_bn_tanh.3} parent=0 // pred_check_branch
    %13 = sbr.rel (0) target = $region13
  $region12: #{conv2d_bn_tanh.3} parent=0 // pred_region
    _
  $region13: #{conv2d_bn_tanh.3} parent=0 // pred_fallthru
    _
  %v14 = vld [vmem:[%s0] sm:$0xff]
  %v15 = vld [vmem:[%s0 + $0x8] sm:$0xff]
  %v16 = vunpack.c.l.bf16 %v14
  %v17 = vunpack.c.h.bf16 %v14
  %v18 = vunpack.c.l.bf16 %v15
  %v19 = vunpack.c.h.bf16 %v15
  %v20 = vld [vmem:[%s1] sm:$0xff]
  %v21 = vld [vmem:[%s2] sm:$0xff]
  %23 = vset.pattern.permute.xlu0 0
  %24 = vperm.xlu0 %23, %v20
  %v25 = vpop.permute.xlu0 %24
  %v27 = vmul.f32 %v16, %v25
  %v28 = vmul.f32 %v17, %v25
  %v29 = vmul.f32 %v18, %v25
  %v30 = vmul.f32 %v19, %v25
  %32 = vset.pattern.permute.xlu0 0
  %33 = vperm.xlu0 %32, %v21
  %v34 = vpop.permute.xlu0 %33
  %v36 = vadd.f32 %v27, %v34
  %v37 = vadd.f32 %v28, %v34
  %v38 = vadd.f32 %v29, %v34
  %v39 = vadd.f32 %v30, %v34
  %v40 = vtanh.pop %v36
  %v41 = vtanh.pop %v37
  %v42 = vtanh.pop %v38
  %v43 = vtanh.pop %v39
  %44 = vst [vmem:[%s3] sm:$0xff] %v40
  %45 = vst [vmem:[%s3 + $0x8] sm:$0xff] %v41
  %46 = vst [vmem:[%s3 + $0x10] sm:$0xff] %v42
  %47 = vst [vmem:[%s3 + $0x18] sm:$0xff] %v43
  // Predicated region
  $region14: #{conv2d_bn_tanh.3} parent=0 // pred_check
    _
  $region15: #{conv2d_bn_tanh.3} parent=0 // pred_check_branch
    %49 = sbr.rel (0) target = $region17
  $region16: #{conv2d_bn_tanh.3} parent=0 // pred_region
    _
  $region17: #{conv2d_bn_tanh.3} parent=0 // pred_fallthru
    _
  // Predicated region
  $region18: #{conv2d_bn_tanh.3} parent=0 // pred_check
    _
  $region19: #{conv2d_bn_tanh.3} parent=0 // pred_check_branch
    %51 = sbr.rel (0) target = $region21
  $region20: #{conv2d_bn_tanh.3} parent=0 // pred_region
    _
  $region21: #{conv2d_bn_tanh.3} parent=0 // pred_fallthru
    _

// kernel: conv2d_bn_tanh.2
$region0: #{conv2d_bn_tanh.2}
  #allocation0 [shape = 'u32[]', space=smem, size = 0x4, offset = 0x4, fixed_abs, tag = 'smem constant byte address 0x4 - core index']
  #allocation1 [shape = 'u32[144,128]{1,0:T(1,128)}', space=vmem, size = 0x12000, scoped, tag = 'internal scratch']
  %s0 = inlined_call_operand.vmem [shape: bf16[2,4,290], index: 0, kind: input, shape index: {}]
  %s1 = inlined_call_operand.vmem [shape: bf16[9,8,4], index: 1, kind: input, shape index: {}]
  %s2 = inlined_call_operand.vmem [shape: bf16[2,256], index: 2, kind: input, shape index: {}]
  %s3 = inlined_call_operand.vmem [shape: bf16[2,8,256], index: 3, kind: output, shape index: {0}]
  %s4 = inlined_call_operand.vmem [shape: f32[2,8,2], index: 4, kind: output, shape index: {1}]
  %5 = xla_tuple %s3, %s4
  %s6 = sld [smem:[#allocation0]]
  $region53: #{conv2d_bn_tanh.2} parent=0
    _
  %s8 = ssub.s32 1, %s6
  %s9 = scalar_select 0, %s8, %s6
  loop: start=0, step=1, limit=4
  $region2: #{conv2d_bn_tanh.2} parent=0 // loop_pre_header
    _
  $region3: #{conv2d_bn_tanh.2} parent=0 // loop_header
    %s11 = sphi 0, %s15
    %p12 = scmp.ge.s32.totalorder %s11, 4
    %s21 = sphi 0, %s23
    %s24 = sphi 0, %s21
    %s25 = sphi 0, %s24
    %s41 = sphi 0, %s25
    %s45 = sphi 0, %s45
    %s47 = sphi 0, %s45
    %s48 = sphi 0, %s47
    %s62 = sphi 0, %s48
    %s66 = sphi 0, %s66
    %s68 = sphi 0, %s66
    %s69 = sphi 0, %s68
    %s83 = sphi 0, %s69
    %s89 = sphi 0, %s91
    %s92 = sphi 0, %s89
    %s93 = sphi 0, %s92
    %s109 = sphi 0, %s93
    %s115 = sphi 0, %s117
    %s118 = sphi 0, %s115
    %s119 = sphi 0, %s118
    %s135 = sphi 0, %s119
  $region4: #{conv2d_bn_tanh.2} parent=0 // loop_header_branch
    %14 = sbr.rel (%p12) target = $region8
  $region5: #{conv2d_bn_tanh.2} parent=0 // loop_body
    %s16 = ssub.s32 %s11, 1
    %s17 = ssub.s32 %s11, 2
    %s18 = sadd.s32 %s11, 1
    %s19 = ssub.s32 %s11, %s18
    %p20 = scmp.eq.s32.totalorder %s19, 0
    %s22 = sadd.s32 %s21, 1
    %s23 = scalar_select %p20, %s21, %s22
    %p26 = pneg %p20
    %p27 = scmp.eq.s32.totalorder %s11, 1
    %p28 = por %p26, %p27
    %p29 = scmp.ne.s32.totalorder %s21, %s24
    %p30 = scmp.eq.s32.totalorder %s11, 0
    %p31 = por %p29, %p30
    %p32 = scmp.ne.s32.totalorder %s21, %s24
    %p33 = scmp.eq.s32.totalorder %s16, 1
    %p34 = por %p32, %p33
    %p35 = scmp.ne.s32.totalorder %s24, %s25
    %p36 = scmp.eq.s32.totalorder %s16, 0
    %p37 = por %p35, %p36
    %p38 = scmp.ne.s32.totalorder %s24, %s25
    %p39 = scmp.eq.s32.totalorder %s17, 1
    %p40 = por %p38, %p39
    %p42 = scmp.ne.s32.totalorder %s25, %s41
    %p43 = scmp.eq.s32.totalorder %s17, 0
    %p44 = por %p42, %p43
    %s46 = sadd.s32 %s45, 1
    %p49 = scmp.eq.s32.totalorder %s11, 1
    %p50 = scmp.ne.s32.totalorder %s45, %s47
    %p51 = scmp.eq.s32.totalorder %s11, 0
    %p52 = por %p50, %p51
    %p53 = scmp.ne.s32.totalorder %s45, %s47
    %p54 = scmp.eq.s32.totalorder %s16, 1
    %p55 = por %p53, %p54
    %p56 = scmp.ne.s32.totalorder %s47, %s48
    %p57 = scmp.eq.s32.totalorder %s16, 0
    %p58 = por %p56, %p57
    %p59 = scmp.ne.s32.totalorder %s47, %s48
    %p60 = scmp.eq.s32.totalorder %s17, 1
    %p61 = por %p59, %p60
    %p63 = scmp.ne.s32.totalorder %s48, %s62
    %p64 = scmp.eq.s32.totalorder %s17, 0
    %p65 = por %p63, %p64
    %s67 = sadd.s32 %s66, 1
    %p70 = scmp.eq.s32.totalorder %s11, 1
    %p71 = scmp.ne.s32.totalorder %s66, %s68
    %p72 = scmp.eq.s32.totalorder %s11, 0
    %p73 = por %p71, %p72
    %p74 = scmp.ne.s32.totalorder %s66, %s68
    %p75 = scmp.eq.s32.totalorder %s16, 1
    %p76 = por %p74, %p75
    %p77 = scmp.ne.s32.totalorder %s68, %s69
    %p78 = scmp.eq.s32.totalorder %s16, 0
    %p79 = por %p77, %p78
    %p80 = scmp.ne.s32.totalorder %s68, %s69
    %p81 = scmp.eq.s32.totalorder %s17, 1
    %p82 = por %p80, %p81
    %p84 = scmp.ne.s32.totalorder %s69, %s83
    %p85 = scmp.eq.s32.totalorder %s17, 0
    %p86 = por %p84, %p85
    %s87 = ssub.s32 %s11, %s18
    %p88 = scmp.eq.s32.totalorder %s87, 0
    %s90 = sadd.s32 %s89, 1
    %s91 = scalar_select %p88, %s89, %s90
    %p94 = pneg %p88
    %p95 = scmp.eq.s32.totalorder %s11, 1
    %p96 = por %p94, %p95
    %p97 = scmp.ne.s32.totalorder %s89, %s92
    %p98 = scmp.eq.s32.totalorder %s11, 0
    %p99 = por %p97, %p98
    %p100 = scmp.ne.s32.totalorder %s89, %s92
    %p101 = scmp.eq.s32.totalorder %s16, 1
    %p102 = por %p100, %p101
    %p103 = scmp.ne.s32.totalorder %s92, %s93
    %p104 = scmp.eq.s32.totalorder %s16, 0
    %p105 = por %p103, %p104
    %p106 = scmp.ne.s32.totalorder %s92, %s93
    %p107 = scmp.eq.s32.totalorder %s17, 1
    %p108 = por %p106, %p107
    %p110 = scmp.ne.s32.totalorder %s93, %s109
    %p111 = scmp.eq.s32.totalorder %s17, 0
    %p112 = por %p110, %p111
    %s113 = ssub.s32 %s11, %s18
    %p114 = scmp.eq.s32.totalorder %s113, 0
    %s116 = sadd.s32 %s115, 1
    %s117 = scalar_select %p114, %s115, %s116
    %p120 = pneg %p114
    %p121 = scmp.eq.s32.totalorder %s11, 1
    %p122 = por %p120, %p121
    %p123 = scmp.ne.s32.totalorder %s115, %s118
    %p124 = scmp.eq.s32.totalorder %s11, 0
    %p125 = por %p123, %p124
    %p126 = scmp.ne.s32.totalorder %s115, %s118
    %p127 = scmp.eq.s32.totalorder %s16, 1
    %p128 = por %p126, %p127
    %p129 = scmp.ne.s32.totalorder %s118, %s119
    %p130 = scmp.eq.s32.totalorder %s16, 0
    %p131 = por %p129, %p130
    %p132 = scmp.ne.s32.totalorder %s118, %s119
    %p133 = scmp.eq.s32.totalorder %s17, 1
    %p134 = por %p132, %p133
    %p136 = scmp.ne.s32.totalorder %s119, %s135
    %p137 = scmp.eq.s32.totalorder %s17, 0
    %p138 = por %p136, %p137
    %p139 = scmp.le.s32.totalorder 1, %s11
    %p140 = scmp.lt.s32.totalorder %s11, 3
    %p141 = pnand %p139, %p140
    %p142 = pneg %p141
    // Predicated region
    $region9: #{conv2d_bn_tanh.2} parent=5 // pred_check
      _
    $region10: #{conv2d_bn_tanh.2} parent=5 // pred_check_branch
      %144 = sbr.rel (%p141) target = $region12
    $region11: #{conv2d_bn_tanh.2} parent=5 // pred_region
      %s145 = ssub.s32 %s11, 1
      // Predicated region
      $region13: #{conv2d_bn_tanh.2} parent=11 // pred_check
        %p146 = pneg %p58
      $region14: #{conv2d_bn_tanh.2} parent=11 // pred_check_branch
        %148 = sbr.rel (%p146) target = $region16
      $region15: #{conv2d_bn_tanh.2} parent=11 // pred_region
        _
      $region16: #{conv2d_bn_tanh.2} parent=11 // pred_fallthru
        _
      // Predicated region
      $region17: #{conv2d_bn_tanh.2} parent=11 // pred_check
        %p149 = pneg %p79
      $region18: #{conv2d_bn_tanh.2} parent=11 // pred_check_branch
        %151 = sbr.rel (%p149) target = $region20
      $region19: #{conv2d_bn_tanh.2} parent=11 // pred_region
        _
      $region20: #{conv2d_bn_tanh.2} parent=11 // pred_fallthru
        _
    $region12: #{conv2d_bn_tanh.2} parent=5 // pred_fallthru
      _
    %p152 = scmp.lt.s32.totalorder %s11, 2
    // Predicated region
    $region21: #{conv2d_bn_tanh.2} parent=5 // pred_check
      %p153 = pneg %p152
    $region22: #{conv2d_bn_tanh.2} parent=5 // pred_check_branch
      %155 = sbr.rel (%p153) target = $region24
    $region23: #{conv2d_bn_tanh.2} parent=5 // pred_region
      // Predicated region
      $region25: #{conv2d_bn_tanh.2} parent=23 // pred_check
        %p156 = pneg %p31
      $region26: #{conv2d_bn_tanh.2} parent=23 // pred_check_branch
        %158 = sbr.rel (%p156) target = $region28
      $region27: #{conv2d_bn_tanh.2} parent=23 // pred_region
        %p159 = scmp.lt.s32.totalorder %s11, 1
        %s160 = scalar_select %p159, %s11, 1
        %s161 = smul.addr %s160, 3
        %s162 = smul.addr %s161, 2
        %s163 = scalar_lea.vmem %s0, %s162
      $region28: #{conv2d_bn_tanh.2} parent=23 // pred_fallthru
        _
    $region24: #{conv2d_bn_tanh.2} parent=5 // pred_fallthru
      _
    %p164 = scmp.le.s32.totalorder 1, %s11
    %p165 = scmp.lt.s32.totalorder %s11, 3
    %p166 = pnand %p164, %p165
    %p167 = pneg %p166
    // Predicated region
    $region29: #{conv2d_bn_tanh.2} parent=5 // pred_check
      _
    $region30: #{conv2d_bn_tanh.2} parent=5 // pred_check_branch
      %169 = sbr.rel (%p166) target = $region32
    $region31: #{conv2d_bn_tanh.2} parent=5 // pred_region
      %s170 = ssub.s32 %s11, 1
      %p171 = scmp.lt.s32.totalorder %s16, 1
      %s172 = scalar_select %p171, %s16, 1
      %s173 = smul.addr %s172, 3
      %s174 = smul.addr %s173, 2
      %s175 = scalar_lea.vmem %s0, %s174
      %p176 = pneg %p37
      %p177 = pneg %p34
      %p178 = pneg %p58
      %p179 = pneg %p55
      %p180 = pneg %p79
      %p181 = pneg %p76
      %p182 = pneg %p105
      %p183 = pneg %p102
      %p184 = scmp.lt.s32.totalorder %s16, 1
      %s185 = scalar_select %p184, %s16, 1
      %s186 = smul.addr %s185, 2
      %s187 = smul.addr %s186, 4
      %s188 = scalar_lea.vmem %s3, %s187
      %p189 = pneg %p131
      %p190 = pneg %p128
      %p191 = scmp.lt.s32.totalorder %s16, 1
      %s192 = scalar_select %p191, %s16, 1
      %s193 = smul.addr %s192, 8
      %s194 = scalar_lea.vmem %s4, %s193
      %p195 = scmp.lt.s32.totalorder %s16, 1
      %s196 = scalar_select %p195, %s16, 1
      %s197 = smul.addr %s196, 3
      %s198 = smul.addr %s197, 2
      %s199 = scalar_lea.vmem %s0, %s198
      %p200 = scmp.lt.s32.totalorder %s16, 1
      %s201 = scalar_select %p200, %s16, 1
      %s202 = smul.addr %s201, 2
      %s203 = smul.addr %s202, 4
      %s204 = scalar_lea.vmem %s3, %s203
      %p205 = scmp.lt.s32.totalorder %s16, 1
      %s206 = scalar_select %p205, %s16, 1
      %s207 = smul.addr %s206, 8
      %s208 = scalar_lea.vmem %s4, %s207
      %v210 = vld [vmem:[%s199] sm:$0x3f]
      %v211 = vld [vmem:[%s2] sm:$0x3]
      %v214 = vunpack.c.l.s4 1966171168
      %v215 = vunpack.c.0.s8 %v214
      %v216 = vlaneseq
      %v217 = vshrl.u32 %v216, 7
      %v218 = vsub.s32 %v215, %v217
      %v219 = vrot.slane %v211, %v218
      %v220 = vcombine.high %v219, %v219
      %v222 = vunpack.c.l.s4 1966171168
      %v223 = vunpack.c.0.s8 %v222
      %v224 = vlaneseq
      %v225 = vshrl.u32 %v224, 7
      %v226 = vsub.s32 %v223, %v225
      %v227 = vrot.slane %v219, %v226
      %v229 = vunpack.c.l.s4 1966171168
      %v230 = vunpack.c.0.s8 %v229
      %v231 = vlaneseq
      %v232 = vshrl.u32 %v231, 7
      %v233 = vsub.s32 %v230, %v232
      %v234 = vrot.slane %v220, %v233
      %v236 = vpack.i.b16 %v227, %v227
      %v238 = vlaneseq
      %v239 = vshrl.u32 %v238, 7
      %v240 = vsub.s32 0, %v239
      %v241 = vrot.slane %v236, %v240
      %v243 = vpack.i.b16 %v234, %v234
      %v245 = vlaneseq
      %v246 = vshrl.u32 %v245, 7
      %v247 = vsub.s32 0, %v246
      %v248 = vrot.slane %v243, %v247
      %v251 = vcombine.low %v241, %v248
      %v253 = vunpack.c.l.s4 1983009808
      %v254 = vunpack.c.0.s8 %v253
      %v255 = vlaneseq
      %v256 = vshrl.u32 %v255, 7
      %v257 = vsub.s32 %v254, %v256
      %v258 = vrot.slane %v251, %v257
      %v260 = vmul.bf16 %v210, %v258
      %v261 = vld [vmem:[%s1] sm:$0xf]
      %s262 = scalar_lea.vmem %s1, 4
      %v263 = vld [vmem:[%s262] sm:$0xf]
      %v265 = vcombine.high %v210, %v210
      %v267 = vunpack.c.l.s4 1983009808
      %v268 = vunpack.c.0.s8 %v267
      %v269 = vlaneseq
      %v270 = vshrl.u32 %v269, 7
      %v271 = vsub.s32 %v268, %v270
      %v272 = vrot.slane %v210, %v271
      %v274 = vunpack.c.l.s4 1983009808
      %v275 = vunpack.c.0.s8 %v274
      %v276 = vlaneseq
      %v277 = vshrl.u32 %v276, 7
      %v278 = vsub.s32 %v275, %v277
      %v279 = vrot.slane %v265, %v278
      %v280 = vcombine.high %v272, %v272
      %281 = vrot.lane.b32.xlu0 %v272, 127
      %v282 = vpop.permute.xlu0 %281
      %283 = vrot.lane.b32.xlu0 %v280, 127
      %v284 = vpop.permute.xlu0 %283
      %285 = vrot.lane.b32.xlu0 %v279, 127
      %v286 = vpop.permute.xlu0 %285
      %vm287 = vcmask 1039360
      %v288 = vsel %vm287, %v282, %v284
      %v289 = vsel %vm287, %v284, %v286
      %vm290 = vcmask 31744
      %v292 = vsel %vm290, %v263, 0
      %vm294 = vcmask 1041408
      %v296 = vsel %vm294, %v288, 0
      %v299 = vsel %vm294, %v289, 0
      %301 = vmatprep.subr.bf16.mxu0 0
      %302 = vmatpush1.bf16.msra.mxu0 0
      %303 = vmatprep.subr.bf16.mxu0 0
      %304 = vmatpush1.bf16.msra.mxu0 0
      %305 = vmatprep.subr.bf16.mxu0 0
      %306 = vmatpush1.bf16.msra.mxu0 0
      %307 = vmatprep.subr.bf16.mxu0 0
      %308 = vmatpush1.bf16.msra.mxu0 0
      %309 = vmatprep.subr.bf16.mxu0 0
      %310 = vmatpush1.bf16.msra.mxu0 0
      %311 = vmatprep.subr.bf16.mxu0 0
      %312 = vmatpush1.bf16.msra.mxu0 0
      %313 = vmatprep.subr.bf16.mxu0 0
      %314 = vmatpush1.bf16.msra.mxu0 0
      %315 = vmatprep.subr.bf16.mxu0 %v299
      %316 = vmatpush1.bf16.msra.mxu0 %v296
      %317 = vmatprep.subr.bf16.mxu0 0
      %318 = vmatpush2.bf16.msra.mxu0 0
      %319 = vmatprep.subr.bf16.mxu0 0
      %320 = vmatpush2.bf16.msra.mxu0 0
      %321 = vmatprep.subr.bf16.mxu0 0
      %322 = vmatpush2.bf16.msra.mxu0 0
      %323 = vmatprep.subr.bf16.mxu0 0
      %324 = vmatpush2.bf16.msra.mxu0 0
      %325 = vmatprep.subr.bf16.mxu0 0
      %326 = vmatpush2.bf16.msra.mxu0 0
      %327 = vmatprep.subr.bf16.mxu0 0
      %328 = vmatpush2.bf16.msra.mxu0 0
      %329 = vmatprep.subr.bf16.mxu0 0
      %330 = vmatpush2.bf16.msra.mxu0 0
      %331 = vmatprep.subr.bf16.mxu0 0
      %332 = vmatpush2.bf16.msra.mxu0 0
      %333 = vmatprep.mubr.bf16.mxu0 0
      %334 = vmatmul.mubr.bf16.gmra.mxu0 %v292
      %v335 = vpop.f32.mrf.mxu0
      %v336 = vadd.f32 0.0, %v335
      %v337 = vpop.f32.mrf.mxu0
      %v338 = vadd.f32 0.0, %v337
      %v339 = vpop.f32.mrf.mxu0
      %v340 = vpop.f32.mrf.mxu0
      %341 = vdwg.mxu0
      %v344 = vunpack.c.l.s4 1983009808
      %v345 = vunpack.c.0.s8 %v344
      %v346 = vlaneseq
      %v347 = vshrl.u32 %v346, 7
      %v348 = vsub.s32 %v345, %v347
      %v349 = vrot.slane %v260, %v348
      %v350 = vcombine.high %v349, %v349
      %v352 = vsel %vm290, %v261, 0
      %v355 = vsel %vm294, %v349, 0
      %v358 = vsel %vm294, %v350, 0
      %360 = vmatprep.subr.bf16.mxu0 0
      %361 = vmatpush1.bf16.msra.mxu0 0
      %362 = vmatprep.subr.bf16.mxu0 0
      %363 = vmatpush1.bf16.msra.mxu0 0
      %364 = vmatprep.subr.bf16.mxu0 0
      %365 = vmatpush1.bf16.msra.mxu0 0
      %366 = vmatprep.subr.bf16.mxu0 0
      %367 = vmatpush1.bf16.msra.mxu0 0
      %368 = vmatprep.subr.bf16.mxu0 0
      %369 = vmatpush1.bf16.msra.mxu0 0
      %370 = vmatprep.subr.bf16.mxu0 0
      %371 = vmatpush1.bf16.msra.mxu0 0
      %372 = vmatprep.subr.bf16.mxu0 0
      %373 = vmatpush1.bf16.msra.mxu0 0
      %374 = vmatprep.subr.bf16.mxu0 %v358
      %375 = vmatpush1.bf16.msra.mxu0 %v355
      %376 = vmatprep.subr.bf16.mxu0 0
      %377 = vmatpush2.bf16.msra.mxu0 0
      %378 = vmatprep.subr.bf16.mxu0 0
      %379 = vmatpush2.bf16.msra.mxu0 0
      %380 = vmatprep.subr.bf16.mxu0 0
      %381 = vmatpush2.bf16.msra.mxu0 0
      %382 = vmatprep.subr.bf16.mxu0 0
      %383 = vmatpush2.bf16.msra.mxu0 0
      %384 = vmatprep.subr.bf16.mxu0 0
      %385 = vmatpush2.bf16.msra.mxu0 0
      %386 = vmatprep.subr.bf16.mxu0 0
      %387 = vmatpush2.bf16.msra.mxu0 0
      %388 = vmatprep.subr.bf16.mxu0 0
      %389 = vmatpush2.bf16.msra.mxu0 0
      %390 = vmatprep.subr.bf16.mxu0 0
      %391 = vmatpush2.bf16.msra.mxu0 0
      %392 = vmatprep.mubr.bf16.mxu0 0
      %393 = vmatmul.mubr.bf16.gmra.mxu0 %v352
      %v394 = vpop.f32.mrf.mxu0
      %v395 = vadd.f32 %v336, %v394
      %v396 = vpop.f32.mrf.mxu0
      %v397 = vadd.f32 %v338, %v396
      %v398 = vpop.f32.mrf.mxu0
      %v399 = vpop.f32.mrf.mxu0
      %400 = vdwg.mxu0
      %v401 = vshrl.u32 %v227, 16
      %v402 = vpack.i.b16 %v401, %v401
      %v404 = vlaneseq
      %v405 = vshrl.u32 %v404, 7
      %v406 = vsub.s32 0, %v405
      %v407 = vrot.slane %v402, %v406
      %v408 = vshrl.u32 %v234, 16
      %v409 = vpack.i.b16 %v408, %v408
      %v411 = vlaneseq
      %v412 = vshrl.u32 %v411, 7
      %v413 = vsub.s32 0, %v412
      %v414 = vrot.slane %v409, %v413
      %v417 = vcombine.low %v407, %v414
      %v419 = vunpack.c.l.s4 1983009808
      %v420 = vunpack.c.0.s8 %v419
      %v421 = vlaneseq
      %v422 = vshrl.u32 %v421, 7
      %v423 = vsub.s32 %v420, %v422
      %v424 = vrot.slane %v417, %v423
      %425 = vrot.lane.b32.xlu0 %v424, 2
      %v426 = vpop.permute.xlu0 %425
      %v427 = vrot.slane %v426, 6
      %vm428 = vcmask 15360
      %v429 = vsel %vm428, %v427, %v426
      %v431 = vmul.bf16 %v210, %v429
      %s432 = scalar_lea.vmem %s1, 8
      %v433 = vld [vmem:[%s432] sm:$0xf]
      %v435 = vcombine.high %v431, %v431
      %v437 = vunpack.c.l.s4 1983009808
      %v438 = vunpack.c.0.s8 %v437
      %v439 = vlaneseq
      %v440 = vshrl.u32 %v439, 7
      %v441 = vsub.s32 %v438, %v440
      %v442 = vrot.slane %v431, %v441
      %v444 = vunpack.c.l.s4 1983009808
      %v445 = vunpack.c.0.s8 %v444
      %v446 = vlaneseq
      %v447 = vshrl.u32 %v446, 7
      %v448 = vsub.s32 %v445, %v447
      %v449 = vrot.slane %v435, %v448
      %v450 = vcombine.high %v442, %v442
      %451 = vrot.lane.b32.xlu0 %v442, 126
      %v452 = vpop.permute.xlu0 %451
      %453 = vrot.lane.b32.xlu0 %v450, 126
      %v454 = vpop.permute.xlu0 %453
      %455 = vrot.lane.b32.xlu0 %v449, 126
      %v456 = vpop.permute.xlu0 %455
      %vm457 = vcmask 1031168
      %v458 = vsel %vm457, %v452, %v454
      %v459 = vsel %vm457, %v454, %v456
      %v461 = vsel %vm290, %v433, 0
      %v464 = vsel %vm294, %v458, 0
      %v467 = vsel %vm294, %v459, 0
      %469 = vmatprep.subr.bf16.mxu0 0
      %470 = vmatpush1.bf16.msra.mxu0 0
      %471 = vmatprep.subr.bf16.mxu0 0
      %472 = vmatpush1.bf16.msra.mxu0 0
      %473 = vmatprep.subr.bf16.mxu0 0
      %474 = vmatpush1.bf16.msra.mxu0 0
      %475 = vmatprep.subr.bf16.mxu0 0
      %476 = vmatpush1.bf16.msra.mxu0 0
      %477 = vmatprep.subr.bf16.mxu0 0
      %478 = vmatpush1.bf16.msra.mxu0 0
      %479 = vmatprep.subr.bf16.mxu0 0
      %480 = vmatpush1.bf16.msra.mxu0 0
      %481 = vmatprep.subr.bf16.mxu0 0
      %482 = vmatpush1.bf16.msra.mxu0 0
      %483 = vmatprep.subr.bf16.mxu0 %v467
      %484 = vmatpush1.bf16.msra.mxu0 %v464
      %485 = vmatprep.subr.bf16.mxu0 0
      %486 = vmatpush2.bf16.msra.mxu0 0
      %487 = vmatprep.subr.bf16.mxu0 0
      %488 = vmatpush2.bf16.msra.mxu0 0
      %489 = vmatprep.subr.bf16.mxu0 0
      %490 = vmatpush2.bf16.msra.mxu0 0
      %491 = vmatprep.subr.bf16.mxu0 0
      %492 = vmatpush2.bf16.msra.mxu0 0
      %493 = vmatprep.subr.bf16.mxu0 0
      %494 = vmatpush2.bf16.msra.mxu0 0
      %495 = vmatprep.subr.bf16.mxu0 0
      %496 = vmatpush2.bf16.msra.mxu0 0
      %497 = vmatprep.subr.bf16.mxu0 0
      %498 = vmatpush2.bf16.msra.mxu0 0
      %499 = vmatprep.subr.bf16.mxu0 0
      %500 = vmatpush2.bf16.msra.mxu0 0
      %501 = vmatprep.mubr.bf16.mxu0 0
      %502 = vmatmul.mubr.bf16.gmra.mxu0 %v461
      %v503 = vpop.f32.mrf.mxu0
      %v504 = vadd.f32 0.0, %v503
      %v505 = vpop.f32.mrf.mxu0
      %v506 = vadd.f32 0.0, %v505
      %v507 = vpop.f32.mrf.mxu0
      %v508 = vpop.f32.mrf.mxu0
      %509 = vdwg.mxu0
      %v510 = vadd.f32 %v395, %v504
      %v511 = vadd.f32 %v397, %v506
      %512 = vrot.lane.b32.xlu0 %v258, 16
      %v513 = vpop.permute.xlu0 %512
      %v514 = vrot.slane %v513, 6
      %vm515 = vcmask 130048
      %v516 = vsel %vm515, %v514, %v513
      %v518 = vmul.bf16 %v210, %v516
      %s519 = scalar_lea.vmem %s1, 12
      %v520 = vld [vmem:[%s519] sm:$0xf]
      %v522 = vcombine.high %v518, %v518
      %v524 = vunpack.c.l.s4 1983009808
      %v525 = vunpack.c.0.s8 %v524
      %v526 = vlaneseq
      %v527 = vshrl.u32 %v526, 7
      %v528 = vsub.s32 %v525, %v527
      %v529 = vrot.slane %v518, %v528
      %v531 = vunpack.c.l.s4 1983009808
      %v532 = vunpack.c.0.s8 %v531
      %v533 = vlaneseq
      %v534 = vshrl.u32 %v533, 7
      %v535 = vsub.s32 %v532, %v534
      %v536 = vrot.slane %v522, %v535
      %v537 = vcombine.high %v529, %v529
      %538 = vrot.lane.b32.xlu0 %v529, 112
      %v539 = vpop.permute.xlu0 %538
      %540 = vrot.lane.b32.xlu0 %v537, 112
      %v541 = vpop.permute.xlu0 %540
      %542 = vrot.lane.b32.xlu0 %v536, 112
      %v543 = vpop.permute.xlu0 %542
      %vm544 = vcmask 916480
      %v545 = vsel %vm544, %v539, %v541
      %v546 = vsel %vm544, %v541, %v543
      %v548 = vsel %vm290, %v520, 0
      %v551 = vsel %vm294, %v545, 0
      %v554 = vsel %vm294, %v546, 0
      %556 = vmatprep.subr.bf16.mxu0 0
      %557 = vmatpush1.bf16.msra.mxu0 0
      %558 = vmatprep.subr.bf16.mxu0 0
      %559 = vmatpush1.bf16.msra.mxu0 0
      %560 = vmatprep.subr.bf16.mxu0 0
      %561 = vmatpush1.bf16.msra.mxu0 0
      %562 = vmatprep.subr.bf16.mxu0 0
      %563 = vmatpush1.bf16.msra.mxu0 0
      %564 = vmatprep.subr.bf16.mxu0 0
      %565 = vmatpush1.bf16.msra.mxu0 0
      %566 = vmatprep.subr.bf16.mxu0 0
      %567 = vmatpush1.bf16.msra.mxu0 0
      %568 = vmatprep.subr.bf16.mxu0 0
      %569 = vmatpush1.bf16.msra.mxu0 0
      %570 = vmatprep.subr.bf16.mxu0 %v554
      %571 = vmatpush1.bf16.msra.mxu0 %v551
      %572 = vmatprep.subr.bf16.mxu0 0
      %573 = vmatpush2.bf16.msra.mxu0 0
      %574 = vmatprep.subr.bf16.mxu0 0
      %575 = vmatpush2.bf16.msra.mxu0 0
      %576 = vmatprep.subr.bf16.mxu0 0
      %577 = vmatpush2.bf16.msra.mxu0 0
      %578 = vmatprep.subr.bf16.mxu0 0
      %579 = vmatpush2.bf16.msra.mxu0 0
      %580 = vmatprep.subr.bf16.mxu0 0
      %581 = vmatpush2.bf16.msra.mxu0 0
      %582 = vmatprep.subr.bf16.mxu0 0
      %583 = vmatpush2.bf16.msra.mxu0 0
      %584 = vmatprep.subr.bf16.mxu0 0
      %585 = vmatpush2.bf16.msra.mxu0 0
      %586 = vmatprep.subr.bf16.mxu0 0
      %587 = vmatpush2.bf16.msra.mxu0 0
      %588 = vmatprep.mubr.bf16.mxu0 0
      %589 = vmatmul.mubr.bf16.gmra.mxu0 %v548
      %v590 = vpop.f32.mrf.mxu0
      %v591 = vadd.f32 0.0, %v590
      %v592 = vpop.f32.mrf.mxu0
      %v593 = vadd.f32 0.0, %v592
      %v594 = vpop.f32.mrf.mxu0
      %v595 = vpop.f32.mrf.mxu0
      %596 = vdwg.mxu0
      %v597 = vadd.f32 %v510, %v591
      %v598 = vadd.f32 %v511, %v593
      %s599 = scalar_lea.vmem %s1, 16
      %v600 = vld [vmem:[%s599] sm:$0xf]
      %601 = vrot.lane.b32.xlu0 %v272, 111
      %v602 = vpop.permute.xlu0 %601
      %603 = vrot.lane.b32.xlu0 %v280, 111
      %v604 = vpop.permute.xlu0 %603
      %605 = vrot.lane.b32.xlu0 %v279, 111
      %v606 = vpop.permute.xlu0 %605
      %vm607 = vcmask 908288
      %v608 = vsel %vm607, %v602, %v604
      %v609 = vsel %vm607, %v604, %v606
      %v611 = vsel %vm290, %v600, 0
      %v614 = vsel %vm294, %v608, 0
      %v617 = vsel %vm294, %v609, 0
      %619 = vmatprep.subr.bf16.mxu0 0
      %620 = vmatpush1.bf16.msra.mxu0 0
      %621 = vmatprep.subr.bf16.mxu0 0
      %622 = vmatpush1.bf16.msra.mxu0 0
      %623 = vmatprep.subr.bf16.mxu0 0
      %624 = vmatpush1.bf16.msra.mxu0 0
      %625 = vmatprep.subr.bf16.mxu0 0
      %626 = vmatpush1.bf16.msra.mxu0 0
      %627 = vmatprep.subr.bf16.mxu0 0
      %628 = vmatpush1.bf16.msra.mxu0 0
      %629 = vmatprep.subr.bf16.mxu0 0
      %630 = vmatpush1.bf16.msra.mxu0 0
      %631 = vmatprep.subr.bf16.mxu0 0
      %632 = vmatpush1.bf16.msra.mxu0 0
      %633 = vmatprep.subr.bf16.mxu0 %v617
      %634 = vmatpush1.bf16.msra.mxu0 %v614
      %635 = vmatprep.subr.bf16.mxu0 0
      %636 = vmatpush2.bf16.msra.mxu0 0
      %637 = vmatprep.subr.bf16.mxu0 0
      %638 = vmatpush2.bf16.msra.mxu0 0
      %639 = vmatprep.subr.bf16.mxu0 0
      %640 = vmatpush2.bf16.msra.mxu0 0
      %641 = vmatprep.subr.bf16.mxu0 0
      %642 = vmatpush2.bf16.msra.mxu0 0
      %643 = vmatprep.subr.bf16.mxu0 0
      %644 = vmatpush2.bf16.msra.mxu0 0
      %645 = vmatprep.subr.bf16.mxu0 0
      %646 = vmatpush2.bf16.msra.mxu0 0
      %647 = vmatprep.subr.bf16.mxu0 0
      %648 = vmatpush2.bf16.msra.mxu0 0
      %649 = vmatprep.subr.bf16.mxu0 0
      %650 = vmatpush2.bf16.msra.mxu0 0
      %651 = vmatprep.mubr.bf16.mxu0 0
      %652 = vmatmul.mubr.bf16.gmra.mxu0 %v611
      %v653 = vpop.f32.mrf.mxu0
      %v654 = vadd.f32 0.0, %v653
      %v655 = vpop.f32.mrf.mxu0
      %v656 = vadd.f32 0.0, %v655
      %v657 = vpop.f32.mrf.mxu0
      %v658 = vpop.f32.mrf.mxu0
      %659 = vdwg.mxu0
      %v660 = vadd.f32 %v597, %v654
      %v661 = vadd.f32 %v598, %v656
      %662 = vrot.lane.b32.xlu0 %v424, 18
      %v663 = vpop.permute.xlu0 %662
      %v664 = vrot.slane %v663, 6
      %vm665 = vcmask 146432
      %v666 = vsel %vm665, %v664, %v663
      %v668 = vmul.bf16 %v210, %v666
      %s669 = scalar_lea.vmem %s1, 20
      %v670 = vld [vmem:[%s669] sm:$0xf]
      %v672 = vcombine.high %v668, %v668
      %v674 = vunpack.c.l.s4 1983009808
      %v675 = vunpack.c.0.s8 %v674
      %v676 = vlaneseq
      %v677 = vshrl.u32 %v676, 7
      %v678 = vsub.s32 %v675, %v677
      %v679 = vrot.slane %v668, %v678
      %v681 = vunpack.c.l.s4 1983009808
      %v682 = vunpack.c.0.s8 %v681
      %v683 = vlaneseq
      %v684 = vshrl.u32 %v683, 7
      %v685 = vsub.s32 %v682, %v684
      %v686 = vrot.slane %v672, %v685
      %v687 = vcombine.high %v679, %v679
      %688 = vrot.lane.b32.xlu0 %v679, 110
      %v689 = vpop.permute.xlu0 %688
      %690 = vrot.lane.b32.xlu0 %v687, 110
      %v691 = vpop.permute.xlu0 %690
      %692 = vrot.lane.b32.xlu0 %v686, 110
      %v693 = vpop.permute.xlu0 %692
      %vm694 = vcmask 900096
      %v695 = vsel %vm694, %v689, %v691
      %v696 = vsel %vm694, %v691, %v693
      %v698 = vsel %vm290, %v670, 0
      %v701 = vsel %vm294, %v695, 0
      %v704 = vsel %vm294, %v696, 0
      %706 = vmatprep.subr.bf16.mxu0 0
      %707 = vmatpush1.bf16.msra.mxu0 0
      %708 = vmatprep.subr.bf16.mxu0 0
      %709 = vmatpush1.bf16.msra.mxu0 0
      %710 = vmatprep.subr.bf16.mxu0 0
      %711 = vmatpush1.bf16.msra.mxu0 0
      %712 = vmatprep.subr.bf16.mxu0 0
      %713 = vmatpush1.bf16.msra.mxu0 0
      %714 = vmatprep.subr.bf16.mxu0 0
      %715 = vmatpush1.bf16.msra.mxu0 0
      %716 = vmatprep.subr.bf16.mxu0 0
      %717 = vmatpush1.bf16.msra.mxu0 0
      %718 = vmatprep.subr.bf16.mxu0 0
      %719 = vmatpush1.bf16.msra.mxu0 0
      %720 = vmatprep.subr.bf16.mxu0 %v704
      %721 = vmatpush1.bf16.msra.mxu0 %v701
      %722 = vmatprep.subr.bf16.mxu0 0
      %723 = vmatpush2.bf16.msra.mxu0 0
      %724 = vmatprep.subr.bf16.mxu0 0
      %725 = vmatpush2.bf16.msra.mxu0 0
      %726 = vmatprep.subr.bf16.mxu0 0
      %727 = vmatpush2.bf16.msra.mxu0 0
      %728 = vmatprep.subr.bf16.mxu0 0
      %729 = vmatpush2.bf16.msra.mxu0 0
      %730 = vmatprep.subr.bf16.mxu0 0
      %731 = vmatpush2.bf16.msra.mxu0 0
      %732 = vmatprep.subr.bf16.mxu0 0
      %733 = vmatpush2.bf16.msra.mxu0 0
      %734 = vmatprep.subr.bf16.mxu0 0
      %735 = vmatpush2.bf16.msra.mxu0 0
      %736 = vmatprep.subr.bf16.mxu0 0
      %737 = vmatpush2.bf16.msra.mxu0 0
      %738 = vmatprep.mubr.bf16.mxu0 0
      %739 = vmatmul.mubr.bf16.gmra.mxu0 %v698
      %v740 = vpop.f32.mrf.mxu0
      %v741 = vadd.f32 0.0, %v740
      %v742 = vpop.f32.mrf.mxu0
      %v743 = vadd.f32 0.0, %v742
      %v744 = vpop.f32.mrf.mxu0
      %v745 = vpop.f32.mrf.mxu0
      %746 = vdwg.mxu0
      %v747 = vadd.f32 %v660, %v741
      %v748 = vadd.f32 %v661, %v743
      %749 = vrot.lane.b32.xlu0 %v258, 32
      %v750 = vpop.permute.xlu0 %749
      %v751 = vrot.slane %v750, 6
      %vm752 = vcmask 261120
      %v753 = vsel %vm752, %v751, %v750
      %v755 = vmul.bf16 %v210, %v753
      %s756 = scalar_lea.vmem %s1, 24
      %v757 = vld [vmem:[%s756] sm:$0xf]
      %v759 = vcombine.high %v755, %v755
      %v761 = vunpack.c.l.s4 1983009808
      %v762 = vunpack.c.0.s8 %v761
      %v763 = vlaneseq
      %v764 = vshrl.u32 %v763, 7
      %v765 = vsub.s32 %v762, %v764
      %v766 = vrot.slane %v755, %v765
      %v768 = vunpack.c.l.s4 1983009808
      %v769 = vunpack.c.0.s8 %v768
      %v770 = vlaneseq
      %v771 = vshrl.u32 %v770, 7
      %v772 = vsub.s32 %v769, %v771
      %v773 = vrot.slane %v759, %v772
      %v774 = vcombine.high %v766, %v766
      %775 = vrot.lane.b32.xlu0 %v766, 96
      %v776 = vpop.permute.xlu0 %775
      %777 = vrot.lane.b32.xlu0 %v774, 96
      %v778 = vpop.permute.xlu0 %777
      %779 = vrot.lane.b32.xlu0 %v773, 96
      %v780 = vpop.permute.xlu0 %779
      %vm781 = vcmask 785408
      %v782 = vsel %vm781, %v776, %v778
      %v783 = vsel %vm781, %v778, %v780
      %v785 = vsel %vm290, %v757, 0
      %v788 = vsel %vm294, %v782, 0
      %v791 = vsel %vm294, %v783, 0
      %793 = vmatprep.subr.bf16.mxu0 0
      %794 = vmatpush1.bf16.msra.mxu0 0
      %795 = vmatprep.subr.bf16.mxu0 0
      %796 = vmatpush1.bf16.msra.mxu0 0
      %797 = vmatprep.subr.bf16.mxu0 0
      %798 = vmatpush1.bf16.msra.mxu0 0
      %799 = vmatprep.subr.bf16.mxu0 0
      %800 = vmatpush1.bf16.msra.mxu0 0
      %801 = vmatprep.subr.bf16.mxu0 0
      %802 = vmatpush1.bf16.msra.mxu0 0
      %803 = vmatprep.subr.bf16.mxu0 0
      %804 = vmatpush1.bf16.msra.mxu0 0
      %805 = vmatprep.subr.bf16.mxu0 0
      %806 = vmatpush1.bf16.msra.mxu0 0
      %807 = vmatprep.subr.bf16.mxu0 %v791
      %808 = vmatpush1.bf16.msra.mxu0 %v788
      %809 = vmatprep.subr.bf16.mxu0 0
      %810 = vmatpush2.bf16.msra.mxu0 0
      %811 = vmatprep.subr.bf16.mxu0 0
      %812 = vmatpush2.bf16.msra.mxu0 0
      %813 = vmatprep.subr.bf16.mxu0 0
      %814 = vmatpush2.bf16.msra.mxu0 0
      %815 = vmatprep.subr.bf16.mxu0 0
      %816 = vmatpush2.bf16.msra.mxu0 0
      %817 = vmatprep.subr.bf16.mxu0 0
      %818 = vmatpush2.bf16.msra.mxu0 0
      %819 = vmatprep.subr.bf16.mxu0 0
      %820 = vmatpush2.bf16.msra.mxu0 0
      %821 = vmatprep.subr.bf16.mxu0 0
      %822 = vmatpush2.bf16.msra.mxu0 0
      %823 = vmatprep.subr.bf16.mxu0 0
      %824 = vmatpush2.bf16.msra.mxu0 0
      %825 = vmatprep.mubr.bf16.mxu0 0
      %826 = vmatmul.mubr.bf16.gmra.mxu0 %v785
      %v827 = vpop.f32.mrf.mxu0
      %v828 = vadd.f32 0.0, %v827
      %v829 = vpop.f32.mrf.mxu0
      %v830 = vadd.f32 0.0, %v829
      %v831 = vpop.f32.mrf.mxu0
      %v832 = vpop.f32.mrf.mxu0
      %833 = vdwg.mxu0
      %v834 = vadd.f32 %v747, %v828
      %v835 = vadd.f32 %v748, %v830
      %s836 = scalar_lea.vmem %s1, 28
      %v837 = vld [vmem:[%s836] sm:$0xf]
      %838 = vrot.lane.b32.xlu0 %v272, 95
      %v839 = vpop.permute.xlu0 %838
      %840 = vrot.lane.b32.xlu0 %v280, 95
      %v841 = vpop.permute.xlu0 %840
      %842 = vrot.lane.b32.xlu0 %v279, 95
      %v843 = vpop.permute.xlu0 %842
      %vm844 = vcmask 777216
      %v845 = vsel %vm844, %v839, %v841
      %v846 = vsel %vm844, %v841, %v843
      %v848 = vsel %vm290, %v837, 0
      %v851 = vsel %vm294, %v845, 0
      %v854 = vsel %vm294, %v846, 0
      %856 = vmatprep.subr.bf16.mxu0 0
      %857 = vmatpush1.bf16.msra.mxu0 0
      %858 = vmatprep.subr.bf16.mxu0 0
      %859 = vmatpush1.bf16.msra.mxu0 0
      %860 = vmatprep.subr.bf16.mxu0 0
      %861 = vmatpush1.bf16.msra.mxu0 0
      %862 = vmatprep.subr.bf16.mxu0 0
      %863 = vmatpush1.bf16.msra.mxu0 0
      %864 = vmatprep.subr.bf16.mxu0 0
      %865 = vmatpush1.bf16.msra.mxu0 0
      %866 = vmatprep.subr.bf16.mxu0 0
      %867 = vmatpush1.bf16.msra.mxu0 0
      %868 = vmatprep.subr.bf16.mxu0 0
      %869 = vmatpush1.bf16.msra.mxu0 0
      %870 = vmatprep.subr.bf16.mxu0 %v854
      %871 = vmatpush1.bf16.msra.mxu0 %v851
      %872 = vmatprep.subr.bf16.mxu0 0
      %873 = vmatpush2.bf16.msra.mxu0 0
      %874 = vmatprep.subr.bf16.mxu0 0
      %875 = vmatpush2.bf16.msra.mxu0 0
      %876 = vmatprep.subr.bf16.mxu0 0
      %877 = vmatpush2.bf16.msra.mxu0 0
      %878 = vmatprep.subr.bf16.mxu0 0
      %879 = vmatpush2.bf16.msra.mxu0 0
      %880 = vmatprep.subr.bf16.mxu0 0
      %881 = vmatpush2.bf16.msra.mxu0 0
      %882 = vmatprep.subr.bf16.mxu0 0
      %883 = vmatpush2.bf16.msra.mxu0 0
      %884 = vmatprep.subr.bf16.mxu0 0
      %885 = vmatpush2.bf16.msra.mxu0 0
      %886 = vmatprep.subr.bf16.mxu0 0
      %887 = vmatpush2.bf16.msra.mxu0 0
      %888 = vmatprep.mubr.bf16.mxu0 0
      %889 = vmatmul.mubr.bf16.gmra.mxu0 %v848
      %v890 = vpop.f32.mrf.mxu0
      %v891 = vadd.f32 0.0, %v890
      %v892 = vpop.f32.mrf.mxu0
      %v893 = vadd.f32 0.0, %v892
      %v894 = vpop.f32.mrf.mxu0
      %v895 = vpop.f32.mrf.mxu0
      %896 = vdwg.mxu0
      %v897 = vadd.f32 %v834, %v891
      %v898 = vadd.f32 %v835, %v893
      %899 = vrot.lane.b32.xlu0 %v424, 34
      %v900 = vpop.permute.xlu0 %899
      %v901 = vrot.slane %v900, 6
      %vm902 = vcmask 277504
      %v903 = vsel %vm902, %v901, %v900
      %v905 = vmul.bf16 %v210, %v903
      %s906 = scalar_lea.vmem %s1, 32
      %v907 = vld [vmem:[%s906] sm:$0xf]
      %v909 = vcombine.high %v905, %v905
      %v911 = vunpack.c.l.s4 1983009808
      %v912 = vunpack.c.0.s8 %v911
      %v913 = vlaneseq
      %v914 = vshrl.u32 %v913, 7
      %v915 = vsub.s32 %v912, %v914
      %v916 = vrot.slane %v905, %v915
      %v918 = vunpack.c.l.s4 1983009808
      %v919 = vunpack.c.0.s8 %v918
      %v920 = vlaneseq
      %v921 = vshrl.u32 %v920, 7
      %v922 = vsub.s32 %v919, %v921
      %v923 = vrot.slane %v909, %v922
      %v924 = vcombine.high %v916, %v916
      %925 = vrot.lane.b32.xlu0 %v916, 94
      %v926 = vpop.permute.xlu0 %925
      %927 = vrot.lane.b32.xlu0 %v924, 94
      %v928 = vpop.permute.xlu0 %927
      %929 = vrot.lane.b32.xlu0 %v923, 94
      %v930 = vpop.permute.xlu0 %929
      %vm931 = vcmask 769024
      %v932 = vsel %vm931, %v926, %v928
      %v933 = vsel %vm931, %v928, %v930
      %v935 = vsel %vm290, %v907, 0
      %v938 = vsel %vm294, %v932, 0
      %v941 = vsel %vm294, %v933, 0
      %943 = vmatprep.subr.bf16.mxu0 0
      %944 = vmatpush1.bf16.msra.mxu0 0
      %945 = vmatprep.subr.bf16.mxu0 0
      %946 = vmatpush1.bf16.msra.mxu0 0
      %947 = vmatprep.subr.bf16.mxu0 0
      %948 = vmatpush1.bf16.msra.mxu0 0
      %949 = vmatprep.subr.bf16.mxu0 0
      %950 = vmatpush1.bf16.msra.mxu0 0
      %951 = vmatprep.subr.bf16.mxu0 0
      %952 = vmatpush1.bf16.msra.mxu0 0
      %953 = vmatprep.subr.bf16.mxu0 0
      %954 = vmatpush1.bf16.msra.mxu0 0
      %955 = vmatprep.subr.bf16.mxu0 0
      %956 = vmatpush1.bf16.msra.mxu0 0
      %957 = vmatprep.subr.bf16.mxu0 %v941
      %958 = vmatpush1.bf16.msra.mxu0 %v938
      %959 = vmatprep.subr.bf16.mxu0 0
      %960 = vmatpush2.bf16.msra.mxu0 0
      %961 = vmatprep.subr.bf16.mxu0 0
      %962 = vmatpush2.bf16.msra.mxu0 0
      %963 = vmatprep.subr.bf16.mxu0 0
      %964 = vmatpush2.bf16.msra.mxu0 0
      %965 = vmatprep.subr.bf16.mxu0 0
      %966 = vmatpush2.bf16.msra.mxu0 0
      %967 = vmatprep.subr.bf16.mxu0 0
      %968 = vmatpush2.bf16.msra.mxu0 0
      %969 = vmatprep.subr.bf16.mxu0 0
      %970 = vmatpush2.bf16.msra.mxu0 0
      %971 = vmatprep.subr.bf16.mxu0 0
      %972 = vmatpush2.bf16.msra.mxu0 0
      %973 = vmatprep.subr.bf16.mxu0 0
      %974 = vmatpush2.bf16.msra.mxu0 0
      %975 = vmatprep.mubr.bf16.mxu0 0
      %976 = vmatmul.mubr.bf16.gmra.mxu0 %v935
      %v977 = vpop.f32.mrf.mxu0
      %v978 = vadd.f32 0.0, %v977
      %v979 = vpop.f32.mrf.mxu0
      %v980 = vadd.f32 0.0, %v979
      %v981 = vpop.f32.mrf.mxu0
      %v982 = vpop.f32.mrf.mxu0
      %983 = vdwg.mxu0
      %v984 = vadd.f32 %v897, %v978
      %v985 = vadd.f32 %v898, %v980
      %v986 = vpack.c.bf16 %v984, %v984
      %v987 = vpack.c.bf16 %v985, %v985
      %v990 = vunpack.c.l.b16 %v986
      %v991 = vunpack.c.l.b16 %v987
      %v992 = vpack.c.b16 %v991, %v990
      %994 = vst [vmem:[%s204] sm:$0xff] %v992
      %v995 = vunpack.c.l.bf16 %v986
      %v996 = vunpack.c.l.bf16 %v987
      %v997 = vadd.f32 %v995, %v996
      %998 = vadd.xlane.f32.xlu0 %v997
      %v999 = vpop.xlane.xlu0 %998
      %v1000 = vmul.f32 %v995, %v995
      %v1001 = vmul.f32 %v996, %v996
      %v1002 = vadd.f32 %v1000, %v1001
      %1003 = vadd.xlane.f32.xlu0 %v1002
      %v1004 = vpop.xlane.xlu0 %1003
      %vm1005 = vcmask 7168
      %v1006 = vsel %vm1005, %v999, %v1004
      %vm1007 = vcmask 15360
      %1008 = vst.msk [vmem:[%s208] sm:$0xff] %vm1007, %v1006
      %p1009 = scmp.lt.s32.totalorder %s16, 1
      %s1010 = scalar_select %p1009, %s16, 1
      %s1011 = smul.addr %s1010, 2
      %s1012 = smul.addr %s1011, 4
      %s1013 = scalar_lea.vmem %s3, %s1012
      %p1014 = scmp.lt.s32.totalorder %s16, 1
      %s1015 = scalar_select %p1014, %s16, 1
      %s1016 = smul.addr %s1015, 8
      %s1017 = scalar_lea.vmem %s4, %s1016
      // Predicated region
      $region33: #{conv2d_bn_tanh.2} parent=31 // pred_check
        %p1018 = pneg %p102
      $region34: #{conv2d_bn_tanh.2} parent=31 // pred_check_branch
        %1020 = sbr.rel (%p1018) target = $region36
      $region35: #{conv2d_bn_tanh.2} parent=31 // pred_region
        _
      $region36: #{conv2d_bn_tanh.2} parent=31 // pred_fallthru
        _
      // Predicated region
      $region37: #{conv2d_bn_tanh.2} parent=31 // pred_check
        %p1021 = pneg %p128
      $region38: #{conv2d_bn_tanh.2} parent=31 // pred_check_branch
        %1023 = sbr.rel (%p1021) target = $region40
      $region39: #{conv2d_bn_tanh.2} parent=31 // pred_region
        _
      $region40: #{conv2d_bn_tanh.2} parent=31 // pred_fallthru
        _
    $region32: #{conv2d_bn_tanh.2} parent=5 // pred_fallthru
      _
    %p1024 = scmp.le.s32.totalorder 2, %s11
    // Predicated region
    $region41: #{conv2d_bn_tanh.2} parent=5 // pred_check
      %p1025 = pneg %p1024
    $region42: #{conv2d_bn_tanh.2} parent=5 // pred_check_branch
      %1027 = sbr.rel (%p1025) target = $region44
    $region43: #{conv2d_bn_tanh.2} parent=5 // pred_region
      %s1028 = ssub.s32 %s11, 2
      // Predicated region
      $region45: #{conv2d_bn_tanh.2} parent=43 // pred_check
        %p1029 = pneg %p108
      $region46: #{conv2d_bn_tanh.2} parent=43 // pred_check_branch
        %1031 = sbr.rel (%p1029) target = $region48
      $region47: #{conv2d_bn_tanh.2} parent=43 // pred_region
        %p1032 = scmp.lt.s32.totalorder %s17, 1
        %s1033 = scalar_select %p1032, %s17, 1
        %s1034 = smul.addr %s1033, 2
        %s1035 = smul.addr %s1034, 4
        %s1036 = scalar_lea.vmem %s3, %s1035
      $region48: #{conv2d_bn_tanh.2} parent=43 // pred_fallthru
        _
      // Predicated region
      $region49: #{conv2d_bn_tanh.2} parent=43 // pred_check
        %p1037 = pneg %p134
      $region50: #{conv2d_bn_tanh.2} parent=43 // pred_check_branch
        %1039 = sbr.rel (%p1037) target = $region52
      $region51: #{conv2d_bn_tanh.2} parent=43 // pred_region
        %p1040 = scmp.lt.s32.totalorder %s17, 1
        %s1041 = scalar_select %p1040, %s17, 1
        %s1042 = smul.addr %s1041, 8
        %s1043 = scalar_lea.vmem %s4, %s1042
      $region52: #{conv2d_bn_tanh.2} parent=43 // pred_fallthru
        _
    $region44: #{conv2d_bn_tanh.2} parent=5 // pred_fallthru
      _
  $region6: #{conv2d_bn_tanh.2} parent=0 // loop_footer
    %s15 = sadd.s32 1, %s11
  $region7: #{conv2d_bn_tanh.2} parent=0 // loop_footer_branch
    %10 = sbr.rel target = $region3
  $region8: #{conv2d_bn_tanh.2} parent=0 // loop_exit
    _

</llo_original>
